<compile_context>
chip_gen: v6e
topology: v6e:2x2x1
jax: 0.10.0
libtpu: 0.0.40
codegen_flags: <defaults>
</compile_context>

<pallas_src>
import functools

import jax
import jax.numpy as jnp
from jax.experimental import pallas as pl
from jax.experimental.pallas import tpu as pltpu


# ----------------------------------------------------------------------------
# chip-aware knobs
# ----------------------------------------------------------------------------
def _vmem_capacity_bytes():
    try:
        return int(pltpu.get_tpu_info().vmem_capacity_bytes)
    except Exception:
        return 64 * 1024 * 1024          # conservative default (v7x per-TC)


def _default_exp_dtype():
    # bf16 VALU/EUP only exists on v6e / v7x; keep the exp chain f32 elsewhere.
    try:
        kind = jax.devices()[0].device_kind.lower()
    except Exception:
        kind = ""
    return jnp.bfloat16 if ("v6" in kind or "v7" in kind) else jnp.float32


def _largest_divisor(n, candidates):
    for t in candidates:
        if t <= n and n % t == 0:
            return t
    return n


def _pick_row_tile(n, heads, out_size, vmem_cap):
    """Largest row tile whose per-step GAT VMEM estimate fits the chip."""
    hd = heads * out_size
    # per-meta-path resident scratch (single-buffered):
    #   x_s (N,HD) f32 + xh_s (H,N,D) bf16 (lane-padded to 128) + asrc_s (H,1,N)
    static = n * hd * 4 + heads * n * 128 * 2 + heads * 8 * n * 4
    budget = int(vmem_cap * 0.55)
    pick = None
    for t in (256, 128, 64, 32):
        if t <= n and n % t == 0:
            pick = t                                  # smallest legal divisor so far
            per_tile = (2 * t * n                     # int8 adjacency (double-buffered)
                        + 4 * heads * t * n * 4       # e / p intermediates (generous f32)
                        + 4 * t * hd * 4)             # output tile + misc
            if static + per_tile <= budget:
                return t
    return pick if pick is not None else n            # tile >= 32 keeps int8 min tile legal


# ----------------------------------------------------------------------------
# Kernel 1: per-meta-path feature projection  x[m] = h @ W[m], tiled over rows
# ----------------------------------------------------------------------------
def project_kernel(h_ref, w_ref, x_ref):
    # h_ref: (TILE_P, F)   w_ref: (1, F, HD)   x_ref: (1, TILE_P, HD)
    x_ref[0] = jnp.dot(h_ref[...], w_ref[0], preferred_element_type=jnp.float32)


# ----------------------------------------------------------------------------
# Kernel 2: dense-adjacency GATConv.
#   grid = (M, row_tiles); m is "parallel" (megacore), i is "arbitrary" so the
#   per-meta-path scratch built at i == 0 is valid for every later row tile.
# ----------------------------------------------------------------------------
def gat_kernel(asrc_ref, adst_ref, bias_ref, adj_ref, x_hbm,
               z_ref, x_s, xh_s, asrc_s, dma_sem,
               *, heads, out_size, exp_dtype, agg_dtype):
    m = pl.program_id(0)
    i = pl.program_id(1)
    tile_i = adj_ref.shape[1]

    # ---- once per meta-path: DMA x[m] and build tile-invariant per-head data
    @pl.when(i == 0)
    def _():
        cp = pltpu.make_async_copy(x_hbm.at[m], x_s, dma_sem.at[0])
        cp.start()
        cp.wait()
        x = x_s[...]                                   # (N, HD) f32
        asrc_all = asrc_ref[...]                       # (1, HD)
        for hidx in range(heads):
            lo = hidx * out_size
            xh = x[:, lo:lo + out_size]                # (N, D)
            xh_s[hidx] = xh.astype(agg_dtype)
            asrc_s[hidx] = jnp.einsum(
                'od,nd->on', asrc_all[:, lo:lo + out_size], xh,
                preferred_element_type=jnp.float32)    # (1, N)

    # ---- per row tile ----------------------------------------------------
    row0 = pl.multiple_of(i * tile_i, tile_i)
    x_dst = x_s[pl.ds(row0, tile_i), :]                # (TILE_I, HD) f32 (resident)
    xa = x_dst * adst_ref[...]                         # (TILE_I, HD)
    a_dst = jnp.stack(
        [jnp.sum(xa[:, h * out_size:(h + 1) * out_size], axis=-1, keepdims=True)
         for h in range(heads)], axis=0)               # (H, TILE_I, 1)

    adj = adj_ref[0]                                   # (TILE_I, N) int8
    # additive mask, computed once and shared by all heads
    adj_bias = jnp.where(adj > 0, 0.0, -1e30).astype(jnp.float32)

    e = a_dst + asrc_s[...]                            # (H, TILE_I, N) f32
    e = jnp.maximum(e, 0.2 * e)                        # LeakyReLU(0.2)
    e = e + adj_bias[None, :, :]                       # mask non-edges
    e = e - jnp.max(e, axis=-1, keepdims=True)         # f32 row max
    p = jnp.exp(e.astype(exp_dtype))                   # EUP exp (bf16 on v6e/v7x)
    denom = jnp.sum(p, axis=-1, keepdims=True, dtype=jnp.float32)

    # Single batched MXU aggregation (bf16 operands, f32 accumulation); the
    # softmax normalization is deferred past the matmul (EUP approx recip).
    agg = jnp.einsum('hin,hnd->hid', p.astype(agg_dtype), xh_s[...],
                     preferred_element_type=jnp.float32)   # (H, TILE_I, D)
    agg = agg * pl.reciprocal(denom, approx=True)

    out = jnp.concatenate([agg[h] for h in range(heads)], axis=-1)  # (TILE_I, HD)
    # TODO(synk): pad HD to 128 lanes end-to-end to avoid masked vst on HD=64.
    z_ref[0] = out + bias_ref[...]


# ----------------------------------------------------------------------------
# Kernel 3: SemanticAttention over stacked meta-path embeddings, row-tiled.
# ----------------------------------------------------------------------------
def semantic_kernel(z_ref, w1_ref, b1_ref, w2_ref, out_ref, *, num_meta_paths):
    # z_ref: (M, TILE_I, HD)  w1: (HD, HIDDEN)  b1: (1, HIDDEN)  w2: (1, HIDDEN)
    M = num_meta_paths
    tile = z_ref.shape[1]
    hd = z_ref.shape[2]
    hidden = w1_ref.shape[1]

    z = z_ref[...]                                                # (M, TILE_I, HD)
    # all M projections in one matmul
    proj = jnp.tanh(
        jnp.dot(z.reshape(M * tile, hd), w1_ref[...],
                preferred_element_type=jnp.float32) + b1_ref[...])
    proj = proj.reshape(M, tile, hidden)

    # score = proj @ w2 replaced by VPU multiply + lane-axis sum (avoids M
    # width-1 MXU matmuls).
    scores = [jnp.sum(proj[m] * w2_ref[...], axis=-1, keepdims=True)
              for m in range(M)]
    w = jnp.concatenate(scores, axis=-1)                          # (TILE_I, M)

    # softmax over the meta-path axis (per node, matching torch.softmax(dim=1))
    w = w - jnp.max(w, axis=-1, keepdims=True)
    beta = jnp.exp(w)
    beta = beta * pl.reciprocal(jnp.sum(beta, axis=-1, keepdims=True), approx=True)

    acc = beta[:, 0:1] * z[0]
    for m in range(1, M):
        acc = acc + beta[:, m:m + 1] * z[m]
    out_ref[...] = acc


# ----------------------------------------------------------------------------
# Wrapper
# ----------------------------------------------------------------------------
def attention_layer_forward(h, adj, params, *, heads, out_size,
                            tile_i=None, agg_dtype=jnp.bfloat16, exp_dtype=None):
    # agg_dtype: MXU operand dtype for the aggregation matmul (bf16 is native
    # on every TPU generation; accumulation stays f32).
    # exp_dtype: dtype of the exp argument; bf16 on v6e/v7x (bf16 EUP), f32
    # elsewhere.  Reductions (row max / row sum) are always f32.
    N, F = h.shape
    M = adj.shape[0]
    HD = heads * out_size
    assert params['lin_w'].shape == (M, F, HD)
    hidden = params['sem_w1'].shape[1]

    if exp_dtype is None:
        exp_dtype = _default_exp_dtype()
    vmem_cap = _vmem_capacity_bytes()
    vmem_limit = min(int(vmem_cap * 0.75), 128 * 1024 * 1024)

    adj = adj.astype(jnp.int8)          # stream adjacency as int8 (4x less HBM)
    if tile_i is None:
        tile_i = _pick_row_tile(N, heads, out_size, vmem_cap)
    assert N % tile_i == 0, "node count must be divisible by the row tile"
    assert tile_i == N or tile_i % 32 == 0, "int8 adjacency needs tile_i % 32 == 0"
    n_tiles = N // tile_i

    # --- 1) per-meta-path projection x[m] = h @ W[m], tiled over rows ---
    tile_p = _largest_divisor(N, (512, 256, 128, 64, 32, 16, 8))
    project = pl.pallas_call(
        project_kernel,
        out_shape=jax.ShapeDtypeStruct((M, N, HD), jnp.float32),
        grid_spec=pltpu.PrefetchScalarGridSpec(
            num_scalar_prefetch=0,
            grid=(M, N // tile_p),
            in_specs=[
                pl.BlockSpec((tile_p, F), lambda m, i: (i, 0)),      # h row tile
                pl.BlockSpec((1, F, HD), lambda m, i: (m, 0, 0)),    # lin weight
            ],
            out_specs=pl.BlockSpec((1, tile_p, HD), lambda m, i: (m, i, 0)),
        ),
        compiler_params=pltpu.CompilerParams(
            dimension_semantics=("arbitrary", "parallel"),
            vmem_limit_bytes=vmem_limit),
    )
    x = project(h, params['lin_w'])

    # --- 2) GATConv per meta-path, tiled over target rows ---
    gat = pl.pallas_call(
        functools.partial(gat_kernel, heads=heads, out_size=out_size,
                          exp_dtype=exp_dtype, agg_dtype=agg_dtype),
        out_shape=jax.ShapeDtypeStruct((M, N, HD), jnp.float32),
        grid_spec=pltpu.PrefetchScalarGridSpec(
            num_scalar_prefetch=0,
            grid=(M, n_tiles),
            in_specs=[
                pl.BlockSpec((1, HD), lambda m, i: (m, 0)),            # att_src
                pl.BlockSpec((1, HD), lambda m, i: (m, 0)),            # att_dst
                pl.BlockSpec((1, HD), lambda m, i: (m, 0)),            # bias
                pl.BlockSpec((1, tile_i, N), lambda m, i: (m, i, 0)),  # int8 adjacency
                pl.BlockSpec(memory_space=pl.ANY),                     # x stays in HBM
            ],
            out_specs=pl.BlockSpec((1, tile_i, HD), lambda m, i: (m, i, 0)),
            scratch_shapes=[
                pltpu.VMEM((N, HD), jnp.float32),              # x_s   (per-m, single-buffered)
                pltpu.VMEM((heads, N, out_size), agg_dtype),   # xh_s  (per-m, hoisted)
                pltpu.VMEM((heads, 1, N), jnp.float32),        # asrc_s (per-m, hoisted)
                pltpu.SemaphoreType.DMA((1,)),
            ]),
        compiler_params=pltpu.CompilerParams(
            # m must own its full row-tile loop so the i==0 scratch init is
            # seen by every later tile -> i is "arbitrary", m is "parallel".
            dimension_semantics=("parallel", "arbitrary"),
            vmem_limit_bytes=vmem_limit),
    )
    z = gat(params['att_src'], params['att_dst'], params['bias'], adj, x)

    # --- 3) semantic attention across meta-paths, tiled over rows ---
    w2_row = params['sem_w2'].reshape(1, hidden)
    sem = pl.pallas_call(
        functools.partial(semantic_kernel, num_meta_paths=M),
        out_shape=jax.ShapeDtypeStruct((N, HD), jnp.float32),
        grid_spec=pltpu.PrefetchScalarGridSpec(
            num_scalar_prefetch=0,
            grid=(n_tiles,),
            in_specs=[
                pl.BlockSpec((M, tile_i, HD), lambda i: (0, i, 0)),   # z tile (all meta-paths)
                pl.BlockSpec((HD, hidden), lambda i: (0, 0)),         # sem_w1 (resident)
                pl.BlockSpec((1, hidden), lambda i: (0, 0)),          # sem_b1
                pl.BlockSpec((1, hidden), lambda i: (0, 0)),          # sem_w2 (row layout)
            ],
            out_specs=pl.BlockSpec((tile_i, HD), lambda i: (i, 0)),
        ),
        compiler_params=pltpu.CompilerParams(
            dimension_semantics=("parallel",),
            vmem_limit_bytes=vmem_limit),
    )
    return sem(z, params['sem_w1'], params['sem_b1'], w2_row)


# ----------------------------------------------------------------------------
# Pure-JAX reference (mirrors the PyTorch forward semantics)
# ----------------------------------------------------------------------------
def reference_forward(h, adj, params, *, heads, out_size):
    M = adj.shape[0]
    zs = []
    for m in range(M):
        x = h @ params['lin_w'][m]
        outs = []
        for hd in range(heads):
            lo, hi = hd * out_size, (hd + 1) * out_size
            xh = x[:, lo:hi]
            a_src = (xh * params['att_src'][m, lo:hi]).sum(-1)
            a_dst = (xh * params['att_dst'][m, lo:hi]).sum(-1)
            e = a_dst[:, None] + a_src[None, :]
            e = jnp.where(e > 0, e, 0.2 * e)
            e = jnp.where(adj[m] > 0, e, -1e30)
            attn = jax.nn.softmax(e, axis=-1)
            outs.append(attn @ xh)
        zs.append(jnp.concatenate(outs, -1) + params['bias'][m])
    z = jnp.stack(zs, axis=1)                                         # (N, M, HD)
    w = jnp.tanh(z @ params['sem_w1'] + params['sem_b1'][0]) @ params['sem_w2']
    beta = jax.nn.softmax(w, axis=1)
    return (beta * z).sum(1)


if __name__ == "__main__":
    # small shapes consistent with the module; tile_i=64 exercises 4 row tiles
    # (i.e. the per-meta-path hoisted scratch is reused across tiles).
    N, F, D, H, M, HIDDEN = 256, 64, 16, 4, 3, 128   # nodes, in, out, heads, meta-paths
    HD = H * D

    key = jax.random.PRNGKey(0)
    keys = jax.random.split(key, 9)

    h = jax.random.normal(keys[0], (N, F), jnp.float32)

    # random int8 adjacency per meta-path (edge j -> i), plus self-loops
    rnd = jax.random.uniform(keys[1], (M, N, N))
    adj = (rnd < 0.1).astype(jnp.int8)
    adj = jnp.maximum(adj, jnp.eye(N, dtype=jnp.int8)[None])

    params = {
        'lin_w':   0.2 * jax.random.normal(keys[2], (M, F, HD), jnp.float32),
        'att_src': 0.2 * jax.random.normal(keys[3], (M, HD), jnp.float32),
        'att_dst': 0.2 * jax.random.normal(keys[4], (M, HD), jnp.float32),
        'bias':    0.1 * jax.random.normal(keys[5], (M, HD), jnp.float32),
        'sem_w1':  0.2 * jax.random.normal(keys[6], (HD, HIDDEN), jnp.float32),
        'sem_b1':  0.1 * jax.random.normal(keys[7], (1, HIDDEN), jnp.float32),
        'sem_w2':  0.2 * jax.random.normal(keys[8], (HIDDEN, 1), jnp.float32),
    }

    out = attention_layer_forward(h, adj, params, heads=H, out_size=D, tile_i=64)
    out = jax.block_until_ready(out)

    ref = reference_forward(h, adj, params, heads=H, out_size=D)
    assert out.shape == (N, HD)
    # bf16 MXU operands (+ bf16 exp on v6e/v7x) and approx reciprocals vs the
    # f32 reference -> slightly looser tolerance than a pure-f32 kernel.
    assert jnp.allclose(out, ref, atol=3e-2, rtol=3e-2), "kernel/reference mismatch"

    print("KERNEL_OK")
</pallas_src>

<mosaic_0001>
module attributes {stable_mosaic.version = 11 : i64} {
  func.func @project_kernel(%arg0: i32, %arg1: i32, %arg2: memref<256x64xf32, #tpu.memory_space<vmem>>, %arg3: memref<1x64x64xf32, #tpu.memory_space<vmem>>, %arg4: memref<1x256x64xf32, #tpu.memory_space<vmem>>) attributes {dimension_semantics = [#tpu.dimension_semantics<arbitrary>, #tpu.dimension_semantics<parallel>], iteration_bounds = array<i64: 3, 1>, scalar_prefetch = 0 : i64, scratch_operands = 0 : i64, tpu.core_type = #tpu.core_type<tc>, window_params = [{transform_indices = @transform_0, window_bounds = array<i64: 256, 64>}, {transform_indices = @transform_1, window_bounds = array<i64: 1, 64, 64>}, {transform_indices = @transform_2, window_bounds = array<i64: 1, 256, 64>}]} {
    %c0 = arith.constant 0 : index
    %c0_0 = arith.constant 0 : index
    %0 = vector.load %arg2[%c0, %c0_0] : memref<256x64xf32, #tpu.memory_space<vmem>>, vector<256x64xf32>
    %c0_1 = arith.constant 0 : index
    %c0_2 = arith.constant 0 : index
    %c0_3 = arith.constant 0 : index
    %1 = vector.load %arg3[%c0_1, %c0_2, %c0_3] : memref<1x64x64xf32, #tpu.memory_space<vmem>>, vector<1x64x64xf32>
    %2 = vector.shape_cast %1 : vector<1x64x64xf32> to vector<64x64xf32>
    %cst = arith.constant dense<0.000000e+00> : vector<256x64xf32>
    %3 = tpu.matmul %0, %2, %cst {dimension_numbers = #tpu.dot_dimension_numbers<[1], [0], [0], [1], [0, 0, 1, 1], [], []>} : vector<256x64xf32>, vector<64x64xf32>, vector<256x64xf32> -> vector<256x64xf32>
    %c0_4 = arith.constant 0 : index
    %c0_5 = arith.constant 0 : index
    %c0_6 = arith.constant 0 : index
    %4 = vector.load %arg4[%c0_4, %c0_5, %c0_6] : memref<1x256x64xf32, #tpu.memory_space<vmem>>, vector<1x256x64xf32>
    %5 = vector.shape_cast %4 : vector<1x256x64xf32> to vector<256x64xf32>
    %6 = vector.shape_cast %3 : vector<256x64xf32> to vector<1x256x64xf32>
    tpu.vector_store %arg4[%c0_4, %c0_5, %c0_6], %6 {strides = array<i32>} : memref<1x256x64xf32, #tpu.memory_space<vmem>>, vector<1x256x64xf32>,
    return
  }
  func.func @transform_0(%arg0: i32, %arg1: i32) -> (i32, i32) {
    %c0_i32 = arith.constant 0 : i32
    %c0_i32_0 = arith.constant 0 : i32
    return %arg1, %c0_i32 : i32, i32
  }
  func.func @transform_1(%arg0: i32, %arg1: i32) -> (i32, i32, i32) {
    %c0_i32 = arith.constant 0 : i32
    %c0_i32_0 = arith.constant 0 : i32
    %c0_i32_1 = arith.constant 0 : i32
    return %arg0, %c0_i32, %c0_i32_0 : i32, i32, i32
  }
  func.func @transform_2(%arg0: i32, %arg1: i32) -> (i32, i32, i32) {
    %c0_i32 = arith.constant 0 : i32
    %c0_i32_0 = arith.constant 0 : i32
    return %arg0, %arg1, %c0_i32 : i32, i32, i32
  }
}

</mosaic_0001>

<llo_original>
// kernel: tpu_custom_call.1
$region0: #{tpu_custom_call.1}
  #allocation0 [shape = 'u32[]', space=smem, size = 0x4, offset = 0x4, fixed_abs, tag = 'smem constant byte address 0x4 - core index']
  #allocation1 [shape = 'u32[144,128]{1,0:T(1,128)}', space=vmem, size = 0x12000, scoped, tag = 'internal scratch']
  %s0 = inlined_call_operand.vmem [shape: f32[256,64], index: 0, kind: input, shape index: {}]
  %s1 = inlined_call_operand.vmem [shape: f32[3,64,64], index: 1, kind: input, shape index: {}]
  %s2 = inlined_call_operand.vmem [shape: f32[3,256,64], index: 2, kind: output, shape index: {}]
  %s3 = sld [smem:[#allocation0]]
  $region41: #{tpu_custom_call.1} parent=0
    _
  %s5 = ssub.s32 1, %s3
  %s6 = scalar_select 0, %s5, %s3
  loop: start=0, step=1, limit=5
  $region2: #{tpu_custom_call.1} parent=0 // loop_pre_header
    _
  $region3: #{tpu_custom_call.1} parent=0 // loop_header
    %s8 = sphi 0, %s12
    %p9 = scmp.ge.s32.totalorder %s8, 5
    %s15 = sphi 0, %s27
    %s16 = sphi 0, %s23
    %s17 = sphi 0, %s15
    %s18 = sphi 0, %s16
    %s19 = sphi 0, %s17
    %s20 = sphi 0, %s18
    %s30 = sphi 0, %s32
    %s33 = sphi 0, %s30
    %s34 = sphi 0, %s33
    %s50 = sphi 0, %s34
    %s56 = sphi 0, %s58
    %s59 = sphi 0, %s56
    %s60 = sphi 0, %s59
    %s76 = sphi 0, %s60
    %s84 = sphi 0, %s86
    %s87 = sphi 0, %s84
    %s88 = sphi 0, %s87
    %s104 = sphi 0, %s88
  $region4: #{tpu_custom_call.1} parent=0 // loop_header_branch
    %11 = sbr.rel (%p9) target = $region8
  $region5: #{tpu_custom_call.1} parent=0 // loop_body
    %s13 = ssub.s32 %s8, 1
    %s14 = ssub.s32 %s8, 2
    %s21 = sadd.s32 1, %s16
    %p22 = scmp.ge.s32.totalorder %s21, 1
    %s23 = scalar_select %p22, 0, %s21
    %s24 = sadd.s32 1, %s15
    %s25 = scalar_select %p22, %s24, %s15
    %p26 = scmp.ge.s32.totalorder %s25, 3
    %s27 = scalar_select %p26, 0, %s25
    %s28 = ssub.s32 %s16, %s23
    %p29 = scmp.eq.s32.totalorder %s28, 0
    %s31 = sadd.s32 %s30, 1
    %s32 = scalar_select %p29, %s30, %s31
    %p35 = pneg %p29
    %p36 = scmp.eq.s32.totalorder %s8, 2
    %p37 = por %p35, %p36
    %p38 = scmp.ne.s32.totalorder %s30, %s33
    %p39 = scmp.eq.s32.totalorder %s8, 0
    %p40 = por %p38, %p39
    %p41 = scmp.ne.s32.totalorder %s30, %s33
    %p42 = scmp.eq.s32.totalorder %s13, 2
    %p43 = por %p41, %p42
    %p44 = scmp.ne.s32.totalorder %s33, %s34
    %p45 = scmp.eq.s32.totalorder %s13, 0
    %p46 = por %p44, %p45
    %p47 = scmp.ne.s32.totalorder %s33, %s34
    %p48 = scmp.eq.s32.totalorder %s14, 2
    %p49 = por %p47, %p48
    %p51 = scmp.ne.s32.totalorder %s34, %s50
    %p52 = scmp.eq.s32.totalorder %s14, 0
    %p53 = por %p51, %p52
    %s54 = ssub.s32 %s15, %s27
    %p55 = scmp.eq.s32.totalorder %s54, 0
    %s57 = sadd.s32 %s56, 1
    %s58 = scalar_select %p55, %s56, %s57
    %p61 = pneg %p55
    %p62 = scmp.eq.s32.totalorder %s8, 2
    %p63 = por %p61, %p62
    %p64 = scmp.ne.s32.totalorder %s56, %s59
    %p65 = scmp.eq.s32.totalorder %s8, 0
    %p66 = por %p64, %p65
    %p67 = scmp.ne.s32.totalorder %s56, %s59
    %p68 = scmp.eq.s32.totalorder %s13, 2
    %p69 = por %p67, %p68
    %p70 = scmp.ne.s32.totalorder %s59, %s60
    %p71 = scmp.eq.s32.totalorder %s13, 0
    %p72 = por %p70, %p71
    %p73 = scmp.ne.s32.totalorder %s59, %s60
    %p74 = scmp.eq.s32.totalorder %s14, 2
    %p75 = por %p73, %p74
    %p77 = scmp.ne.s32.totalorder %s60, %s76
    %p78 = scmp.eq.s32.totalorder %s14, 0
    %p79 = por %p77, %p78
    %s80 = ssub.s32 %s15, %s27
    %s81 = ssub.s32 %s16, %s23
    %s82 = sor.u32 %s80, %s81
    %p83 = scmp.eq.s32.totalorder %s82, 0
    %s85 = sadd.s32 %s84, 1
    %s86 = scalar_select %p83, %s84, %s85
    %p89 = pneg %p83
    %p90 = scmp.eq.s32.totalorder %s8, 2
    %p91 = por %p89, %p90
    %p92 = scmp.ne.s32.totalorder %s84, %s87
    %p93 = scmp.eq.s32.totalorder %s8, 0
    %p94 = por %p92, %p93
    %p95 = scmp.ne.s32.totalorder %s84, %s87
    %p96 = scmp.eq.s32.totalorder %s13, 2
    %p97 = por %p95, %p96
    %p98 = scmp.ne.s32.totalorder %s87, %s88
    %p99 = scmp.eq.s32.totalorder %s13, 0
    %p100 = por %p98, %p99
    %p101 = scmp.ne.s32.totalorder %s87, %s88
    %p102 = scmp.eq.s32.totalorder %s14, 2
    %p103 = por %p101, %p102
    %p105 = scmp.ne.s32.totalorder %s88, %s104
    %p106 = scmp.eq.s32.totalorder %s14, 0
    %p107 = por %p105, %p106
    %p108 = scmp.le.s32.totalorder 1, %s8
    %p109 = scmp.lt.s32.totalorder %s8, 4
    %p110 = pnand %p108, %p109
    %p111 = pneg %p110
    // Predicated region
    $region9: #{tpu_custom_call.1} parent=5 // pred_check
      _
    $region10: #{tpu_custom_call.1} parent=5 // pred_check_branch
      %113 = sbr.rel (%p110) target = $region12
    $region11: #{tpu_custom_call.1} parent=5 // pred_region
      %s114 = ssub.s32 %s8, 1
      // Predicated region
      $region13: #{tpu_custom_call.1} parent=11 // pred_check
        %p115 = pneg %p46
      $region14: #{tpu_custom_call.1} parent=11 // pred_check_branch
        %117 = sbr.rel (%p115) target = $region16
      $region15: #{tpu_custom_call.1} parent=11 // pred_region
        %s118 = smul.u32 32, %s18
        %p119 = scmp.lt.s32.totalorder %s118, 31
        %s120 = scalar_select %p119, %s118, 31
        %s121 = smul.addr %s120, 8
        %s122 = scalar_lea.vmem %s0, %s121
        %s123 = smul.u32 32, %s18
      $region16: #{tpu_custom_call.1} parent=11 // pred_fallthru
        _
    $region12: #{tpu_custom_call.1} parent=5 // pred_fallthru
      _
    %p124 = scmp.lt.s32.totalorder %s8, 3
    // Predicated region
    $region17: #{tpu_custom_call.1} parent=5 // pred_check
      %p125 = pneg %p124
    $region18: #{tpu_custom_call.1} parent=5 // pred_check_branch
      %127 = sbr.rel (%p125) target = $region20
    $region19: #{tpu_custom_call.1} parent=5 // pred_region
      // Predicated region
      $region21: #{tpu_custom_call.1} parent=19 // pred_check
        %p128 = pneg %p66
      $region22: #{tpu_custom_call.1} parent=19 // pred_check_branch
        %130 = sbr.rel (%p128) target = $region24
      $region23: #{tpu_custom_call.1} parent=19 // pred_region
        %p131 = scmp.lt.s32.totalorder %s15, 2
        %s132 = scalar_select %p131, %s15, 2
        %s133 = smul.addr %s132, 8
        %s134 = smul.addr %s133, 8
        %s135 = scalar_lea.vmem %s1, %s134
      $region24: #{tpu_custom_call.1} parent=19 // pred_fallthru
        _
    $region20: #{tpu_custom_call.1} parent=5 // pred_fallthru
      _
    %p136 = scmp.le.s32.totalorder 1, %s8
    %p137 = scmp.lt.s32.totalorder %s8, 4
    %p138 = pnand %p136, %p137
    %p139 = pneg %p138
    // Predicated region
    $region25: #{tpu_custom_call.1} parent=5 // pred_check
      _
    $region26: #{tpu_custom_call.1} parent=5 // pred_check_branch
      %141 = sbr.rel (%p138) target = $region28
    $region27: #{tpu_custom_call.1} parent=5 // pred_region
      %s142 = ssub.s32 %s8, 1
      %s143 = smul.u32 32, %s18
      %p144 = scmp.lt.s32.totalorder %s143, 31
      %s145 = scalar_select %p144, %s143, 31
      %s146 = smul.addr %s145, 8
      %s147 = scalar_lea.vmem %s0, %s146
      %p148 = pneg %p46
      %p149 = pneg %p43
      %p150 = scmp.lt.s32.totalorder %s17, 2
      %s151 = scalar_select %p150, %s17, 2
      %s152 = smul.addr %s151, 8
      %s153 = smul.addr %s152, 8
      %s154 = scalar_lea.vmem %s1, %s153
      %p155 = pneg %p72
      %p156 = pneg %p69
      %p157 = pneg %p100
      %p158 = pneg %p97
      %s159 = smul.u32 32, %s18
      %p160 = scmp.lt.s32.totalorder %s17, 2
      %s161 = scalar_select %p160, %s17, 2
      %p162 = scmp.lt.s32.totalorder %s159, 31
      %s163 = scalar_select %p162, %s159, 31
      %s164 = smul.addr %s161, 32
      %s165 = sadd.s32 %s163, %s164
      %s166 = smul.addr %s165, 8
      %s167 = scalar_lea.vmem %s2, %s166
      %s168 = smul.u32 32, %s18
      %p169 = scmp.lt.s32.totalorder %s168, 31
      %s170 = scalar_select %p169, %s168, 31
      %s171 = smul.addr %s170, 8
      %s172 = scalar_lea.vmem %s0, %s171
      %s173 = smul.u32 32, %s18
      %p174 = scmp.lt.s32.totalorder %s17, 2
      %s175 = scalar_select %p174, %s17, 2
      %s176 = smul.addr %s175, 8
      %s177 = smul.addr %s176, 8
      %s178 = scalar_lea.vmem %s1, %s177
      %s179 = smul.u32 32, %s18
      %p180 = scmp.lt.s32.totalorder %s17, 2
      %s181 = scalar_select %p180, %s17, 2
      %p182 = scmp.lt.s32.totalorder %s179, 31
      %s183 = scalar_select %p182, %s179, 31
      %s184 = smul.addr %s181, 32
      %s185 = sadd.s32 %s183, %s184
      %s186 = smul.addr %s185, 8
      %s187 = scalar_lea.vmem %s2, %s186
      %s188 = smul.u32 32, %s18
      %v189 = vld [vmem:[%s172] sm:$0xff]
      %v190 = vld [vmem:[%s172 + $0x8] sm:$0xff]
      %v191 = vld [vmem:[%s172 + $0x10] sm:$0xff]
      %v192 = vld [vmem:[%s172 + $0x18] sm:$0xff]
      %v193 = vld [vmem:[%s172 + $0x20] sm:$0xff]
      %v194 = vld [vmem:[%s172 + $0x28] sm:$0xff]
      %v195 = vld [vmem:[%s172 + $0x30] sm:$0xff]
      %v196 = vld [vmem:[%s172 + $0x38] sm:$0xff]
      %v197 = vld [vmem:[%s172 + $0x40] sm:$0xff]
      %v198 = vld [vmem:[%s172 + $0x48] sm:$0xff]
      %v199 = vld [vmem:[%s172 + $0x50] sm:$0xff]
      %v200 = vld [vmem:[%s172 + $0x58] sm:$0xff]
      %v201 = vld [vmem:[%s172 + $0x60] sm:$0xff]
      %v202 = vld [vmem:[%s172 + $0x68] sm:$0xff]
      %v203 = vld [vmem:[%s172 + $0x70] sm:$0xff]
      %v204 = vld [vmem:[%s172 + $0x78] sm:$0xff]
      %v205 = vld [vmem:[%s172 + $0x80] sm:$0xff]
      %v206 = vld [vmem:[%s172 + $0x88] sm:$0xff]
      %v207 = vld [vmem:[%s172 + $0x90] sm:$0xff]
      %v208 = vld [vmem:[%s172 + $0x98] sm:$0xff]
      %v209 = vld [vmem:[%s172 + $0xa0] sm:$0xff]
      %v210 = vld [vmem:[%s172 + $0xa8] sm:$0xff]
      %v211 = vld [vmem:[%s172 + $0xb0] sm:$0xff]
      %v212 = vld [vmem:[%s172 + $0xb8] sm:$0xff]
      %v213 = vld [vmem:[%s172 + $0xc0] sm:$0xff]
      %v214 = vld [vmem:[%s172 + $0xc8] sm:$0xff]
      %v215 = vld [vmem:[%s172 + $0xd0] sm:$0xff]
      %v216 = vld [vmem:[%s172 + $0xd8] sm:$0xff]
      %v217 = vld [vmem:[%s172 + $0xe0] sm:$0xff]
      %v218 = vld [vmem:[%s172 + $0xe8] sm:$0xff]
      %v219 = vld [vmem:[%s172 + $0xf0] sm:$0xff]
      %v220 = vld [vmem:[%s172 + $0xf8] sm:$0xff]
      %v221 = vld [vmem:[%s178] sm:$0xff]
      %v222 = vld [vmem:[%s178 + $0x8] sm:$0xff]
      %v223 = vld [vmem:[%s178 + $0x10] sm:$0xff]
      %v224 = vld [vmem:[%s178 + $0x18] sm:$0xff]
      %v225 = vld [vmem:[%s178 + $0x20] sm:$0xff]
      %v226 = vld [vmem:[%s178 + $0x28] sm:$0xff]
      %v227 = vld [vmem:[%s178 + $0x30] sm:$0xff]
      %v228 = vld [vmem:[%s178 + $0x38] sm:$0xff]
      %vm229 = vcmask 523264
      %v231 = vsel %vm229, %v189, 0
      %v234 = vsel %vm229, %v190, 0
      %v237 = vsel %vm229, %v191, 0
      %v240 = vsel %vm229, %v192, 0
      %v243 = vsel %vm229, %v193, 0
      %v246 = vsel %vm229, %v194, 0
      %v249 = vsel %vm229, %v195, 0
      %v252 = vsel %vm229, %v196, 0
      %v255 = vsel %vm229, %v197, 0
      %v258 = vsel %vm229, %v198, 0
      %v261 = vsel %vm229, %v199, 0
      %v264 = vsel %vm229, %v200, 0
      %v267 = vsel %vm229, %v201, 0
      %v270 = vsel %vm229, %v202, 0
      %v273 = vsel %vm229, %v203, 0
      %v276 = vsel %vm229, %v204, 0
      %v279 = vsel %vm229, %v205, 0
      %v282 = vsel %vm229, %v206, 0
      %v285 = vsel %vm229, %v207, 0
      %v288 = vsel %vm229, %v208, 0
      %v291 = vsel %vm229, %v209, 0
      %v294 = vsel %vm229, %v210, 0
      %v297 = vsel %vm229, %v211, 0
      %v300 = vsel %vm229, %v212, 0
      %v303 = vsel %vm229, %v213, 0
      %v306 = vsel %vm229, %v214, 0
      %v309 = vsel %vm229, %v215, 0
      %v312 = vsel %vm229, %v216, 0
      %v315 = vsel %vm229, %v217, 0
      %v318 = vsel %vm229, %v218, 0
      %v321 = vsel %vm229, %v219, 0
      %v324 = vsel %vm229, %v220, 0
      %326 = vmatprep.subr.mxu0 0.0
      %327 = vmatpush1.msra.mxu0 0.0
      %328 = vmatprep.subr.mxu0 0.0
      %329 = vmatpush1.msra.mxu0 0.0
      %330 = vmatprep.subr.mxu0 0.0
      %331 = vmatpush1.msra.mxu0 0.0
      %332 = vmatprep.subr.mxu0 0.0
      %333 = vmatpush1.msra.mxu0 0.0
      %334 = vmatprep.subr.mxu0 0.0
      %335 = vmatpush1.msra.mxu0 0.0
      %336 = vmatprep.subr.mxu0 0.0
      %337 = vmatpush1.msra.mxu0 0.0
      %338 = vmatprep.subr.mxu0 0.0
      %339 = vmatpush1.msra.mxu0 0.0
      %340 = vmatprep.subr.mxu0 0.0
      %341 = vmatpush1.msra.mxu0 0.0
      %342 = vmatprep.subr.mxu0 0.0
      %343 = vmatpush1.msra.mxu0 %v228
      %344 = vmatprep.subr.mxu0 0.0
      %345 = vmatpush1.msra.mxu0 %v227
      %346 = vmatprep.subr.mxu0 0.0
      %347 = vmatpush1.msra.mxu0 %v226
      %348 = vmatprep.subr.mxu0 0.0
      %349 = vmatpush1.msra.mxu0 %v225
      %350 = vmatprep.subr.mxu0 0.0
      %351 = vmatpush1.msra.mxu0 %v224
      %352 = vmatprep.subr.mxu0 0.0
      %353 = vmatpush1.msra.mxu0 %v223
      %354 = vmatprep.subr.mxu0 0.0
      %355 = vmatpush1.msra.mxu0 %v222
      %356 = vmatprep.subr.mxu0 0.0
      %357 = vmatpush1.msra.mxu0 %v221
      %358 = vmatprep.subr.mxu0 0.0
      %359 = vmatpush2.msra.mxu0 0.0
      %360 = vmatprep.subr.mxu0 0.0
      %361 = vmatpush2.msra.mxu0 0.0
      %362 = vmatprep.subr.mxu0 0.0
      %363 = vmatpush2.msra.mxu0 0.0
      %364 = vmatprep.subr.mxu0 0.0
      %365 = vmatpush2.msra.mxu0 0.0
      %366 = vmatprep.subr.mxu0 0.0
      %367 = vmatpush2.msra.mxu0 0.0
      %368 = vmatprep.subr.mxu0 0.0
      %369 = vmatpush2.msra.mxu0 0.0
      %370 = vmatprep.subr.mxu0 0.0
      %371 = vmatpush2.msra.mxu0 0.0
      %372 = vmatprep.subr.mxu0 0.0
      %373 = vmatpush2.msra.mxu0 0.0
      %374 = vmatprep.subr.mxu0 0.0
      %375 = vmatpush2.msra.mxu0 0.0
      %376 = vmatprep.subr.mxu0 0.0
      %377 = vmatpush2.msra.mxu0 0.0
      %378 = vmatprep.subr.mxu0 0.0
      %379 = vmatpush2.msra.mxu0 0.0
      %380 = vmatprep.subr.mxu0 0.0
      %381 = vmatpush2.msra.mxu0 0.0
      %382 = vmatprep.subr.mxu0 0.0
      %383 = vmatpush2.msra.mxu0 0.0
      %384 = vmatprep.subr.mxu0 0.0
      %385 = vmatpush2.msra.mxu0 0.0
      %386 = vmatprep.subr.mxu0 0.0
      %387 = vmatpush2.msra.mxu0 0.0
      %388 = vmatprep.subr.mxu0 0.0
      %389 = vmatpush2.msra.mxu0 0.0
      %390 = vmatprep.mubr.f32.mxu0 0.0
      %391 = vmatmul.mubr.f32.gmra.mxu0 %v231
      %v392 = vpop.f32.mrf.mxu0
      %v393 = vadd.f32 0.0, %v392
      %v394 = vpop.f32.mrf.mxu0
      %395 = vmatprep.mubr.f32.mxu0 0.0
      %396 = vmatmul.mubr.f32.gmra.mxu0 %v234
      %v397 = vpop.f32.mrf.mxu0
      %v398 = vadd.f32 0.0, %v397
      %v399 = vpop.f32.mrf.mxu0
      %400 = vmatprep.mubr.f32.mxu0 0.0
      %401 = vmatmul.mubr.f32.gmra.mxu0 %v237
      %v402 = vpop.f32.mrf.mxu0
      %v403 = vadd.f32 0.0, %v402
      %v404 = vpop.f32.mrf.mxu0
      %405 = vmatprep.mubr.f32.mxu0 0.0
      %406 = vmatmul.mubr.f32.gmra.mxu0 %v240
      %v407 = vpop.f32.mrf.mxu0
      %v408 = vadd.f32 0.0, %v407
      %v409 = vpop.f32.mrf.mxu0
      %410 = vmatprep.mubr.f32.mxu0 0.0
      %411 = vmatmul.mubr.f32.gmra.mxu0 %v243
      %v412 = vpop.f32.mrf.mxu0
      %v413 = vadd.f32 0.0, %v412
      %v414 = vpop.f32.mrf.mxu0
      %415 = vmatprep.mubr.f32.mxu0 0.0
      %416 = vmatmul.mubr.f32.gmra.mxu0 %v246
      %v417 = vpop.f32.mrf.mxu0
      %v418 = vadd.f32 0.0, %v417
      %v419 = vpop.f32.mrf.mxu0
      %420 = vmatprep.mubr.f32.mxu0 0.0
      %421 = vmatmul.mubr.f32.gmra.mxu0 %v249
      %v422 = vpop.f32.mrf.mxu0
      %v423 = vadd.f32 0.0, %v422
      %v424 = vpop.f32.mrf.mxu0
      %425 = vmatprep.mubr.f32.mxu0 0.0
      %426 = vmatmul.mubr.f32.gmra.mxu0 %v252
      %v427 = vpop.f32.mrf.mxu0
      %v428 = vadd.f32 0.0, %v427
      %v429 = vpop.f32.mrf.mxu0
      %430 = vmatprep.mubr.f32.mxu0 0.0
      %431 = vmatmul.mubr.f32.gmra.mxu0 %v255
      %v432 = vpop.f32.mrf.mxu0
      %v433 = vadd.f32 0.0, %v432
      %v434 = vpop.f32.mrf.mxu0
      %435 = vmatprep.mubr.f32.mxu0 0.0
      %436 = vmatmul.mubr.f32.gmra.mxu0 %v258
      %v437 = vpop.f32.mrf.mxu0
      %v438 = vadd.f32 0.0, %v437
      %v439 = vpop.f32.mrf.mxu0
      %440 = vmatprep.mubr.f32.mxu0 0.0
      %441 = vmatmul.mubr.f32.gmra.mxu0 %v261
      %v442 = vpop.f32.mrf.mxu0
      %v443 = vadd.f32 0.0, %v442
      %v444 = vpop.f32.mrf.mxu0
      %445 = vmatprep.mubr.f32.mxu0 0.0
      %446 = vmatmul.mubr.f32.gmra.mxu0 %v264
      %v447 = vpop.f32.mrf.mxu0
      %v448 = vadd.f32 0.0, %v447
      %v449 = vpop.f32.mrf.mxu0
      %450 = vmatprep.mubr.f32.mxu0 0.0
      %451 = vmatmul.mubr.f32.gmra.mxu0 %v267
      %v452 = vpop.f32.mrf.mxu0
      %v453 = vadd.f32 0.0, %v452
      %v454 = vpop.f32.mrf.mxu0
      %455 = vmatprep.mubr.f32.mxu0 0.0
      %456 = vmatmul.mubr.f32.gmra.mxu0 %v270
      %v457 = vpop.f32.mrf.mxu0
      %v458 = vadd.f32 0.0, %v457
      %v459 = vpop.f32.mrf.mxu0
      %460 = vmatprep.mubr.f32.mxu0 0.0
      %461 = vmatmul.mubr.f32.gmra.mxu0 %v273
      %v462 = vpop.f32.mrf.mxu0
      %v463 = vadd.f32 0.0, %v462
      %v464 = vpop.f32.mrf.mxu0
      %465 = vmatprep.mubr.f32.mxu0 0.0
      %466 = vmatmul.mubr.f32.gmra.mxu0 %v276
      %v467 = vpop.f32.mrf.mxu0
      %v468 = vadd.f32 0.0, %v467
      %v469 = vpop.f32.mrf.mxu0
      %470 = vmatprep.mubr.f32.mxu0 0.0
      %471 = vmatmul.mubr.f32.gmra.mxu0 %v279
      %v472 = vpop.f32.mrf.mxu0
      %v473 = vadd.f32 0.0, %v472
      %v474 = vpop.f32.mrf.mxu0
      %475 = vmatprep.mubr.f32.mxu0 0.0
      %476 = vmatmul.mubr.f32.gmra.mxu0 %v282
      %v477 = vpop.f32.mrf.mxu0
      %v478 = vadd.f32 0.0, %v477
      %v479 = vpop.f32.mrf.mxu0
      %480 = vmatprep.mubr.f32.mxu0 0.0
      %481 = vmatmul.mubr.f32.gmra.mxu0 %v285
      %v482 = vpop.f32.mrf.mxu0
      %v483 = vadd.f32 0.0, %v482
      %v484 = vpop.f32.mrf.mxu0
      %485 = vmatprep.mubr.f32.mxu0 0.0
      %486 = vmatmul.mubr.f32.gmra.mxu0 %v288
      %v487 = vpop.f32.mrf.mxu0
      %v488 = vadd.f32 0.0, %v487
      %v489 = vpop.f32.mrf.mxu0
      %490 = vmatprep.mubr.f32.mxu0 0.0
      %491 = vmatmul.mubr.f32.gmra.mxu0 %v291
      %v492 = vpop.f32.mrf.mxu0
      %v493 = vadd.f32 0.0, %v492
      %v494 = vpop.f32.mrf.mxu0
      %495 = vmatprep.mubr.f32.mxu0 0.0
      %496 = vmatmul.mubr.f32.gmra.mxu0 %v294
      %v497 = vpop.f32.mrf.mxu0
      %v498 = vadd.f32 0.0, %v497
      %v499 = vpop.f32.mrf.mxu0
      %500 = vmatprep.mubr.f32.mxu0 0.0
      %501 = vmatmul.mubr.f32.gmra.mxu0 %v297
      %v502 = vpop.f32.mrf.mxu0
      %v503 = vadd.f32 0.0, %v502
      %v504 = vpop.f32.mrf.mxu0
      %505 = vmatprep.mubr.f32.mxu0 0.0
      %506 = vmatmul.mubr.f32.gmra.mxu0 %v300
      %v507 = vpop.f32.mrf.mxu0
      %v508 = vadd.f32 0.0, %v507
      %v509 = vpop.f32.mrf.mxu0
      %510 = vmatprep.mubr.f32.mxu0 0.0
      %511 = vmatmul.mubr.f32.gmra.mxu0 %v303
      %v512 = vpop.f32.mrf.mxu0
      %v513 = vadd.f32 0.0, %v512
      %v514 = vpop.f32.mrf.mxu0
      %515 = vmatprep.mubr.f32.mxu0 0.0
      %516 = vmatmul.mubr.f32.gmra.mxu0 %v306
      %v517 = vpop.f32.mrf.mxu0
      %v518 = vadd.f32 0.0, %v517
      %v519 = vpop.f32.mrf.mxu0
      %520 = vmatprep.mubr.f32.mxu0 0.0
      %521 = vmatmul.mubr.f32.gmra.mxu0 %v309
      %v522 = vpop.f32.mrf.mxu0
      %v523 = vadd.f32 0.0, %v522
      %v524 = vpop.f32.mrf.mxu0
      %525 = vmatprep.mubr.f32.mxu0 0.0
      %526 = vmatmul.mubr.f32.gmra.mxu0 %v312
      %v527 = vpop.f32.mrf.mxu0
      %v528 = vadd.f32 0.0, %v527
      %v529 = vpop.f32.mrf.mxu0
      %530 = vmatprep.mubr.f32.mxu0 0.0
      %531 = vmatmul.mubr.f32.gmra.mxu0 %v315
      %v532 = vpop.f32.mrf.mxu0
      %v533 = vadd.f32 0.0, %v532
      %v534 = vpop.f32.mrf.mxu0
      %535 = vmatprep.mubr.f32.mxu0 0.0
      %536 = vmatmul.mubr.f32.gmra.mxu0 %v318
      %v537 = vpop.f32.mrf.mxu0
      %v538 = vadd.f32 0.0, %v537
      %v539 = vpop.f32.mrf.mxu0
      %540 = vmatprep.mubr.f32.mxu0 0.0
      %541 = vmatmul.mubr.f32.gmra.mxu0 %v321
      %v542 = vpop.f32.mrf.mxu0
      %v543 = vadd.f32 0.0, %v542
      %v544 = vpop.f32.mrf.mxu0
      %545 = vmatprep.mubr.f32.mxu0 0.0
      %546 = vmatmul.mubr.f32.gmra.mxu0 %v324
      %v547 = vpop.f32.mrf.mxu0
      %v548 = vadd.f32 0.0, %v547
      %v549 = vpop.f32.mrf.mxu0
      %550 = vdwg.mxu0
      %551 = vst.msk [vmem:[%s187] sm:$0xff] %vm229, %v393
      %552 = vst.msk [vmem:[%s187 + $0x8] sm:$0xff] %vm229, %v398
      %553 = vst.msk [vmem:[%s187 + $0x10] sm:$0xff] %vm229, %v403
      %554 = vst.msk [vmem:[%s187 + $0x18] sm:$0xff] %vm229, %v408
      %555 = vst.msk [vmem:[%s187 + $0x20] sm:$0xff] %vm229, %v413
      %556 = vst.msk [vmem:[%s187 + $0x28] sm:$0xff] %vm229, %v418
      %557 = vst.msk [vmem:[%s187 + $0x30] sm:$0xff] %vm229, %v423
      %558 = vst.msk [vmem:[%s187 + $0x38] sm:$0xff] %vm229, %v428
      %559 = vst.msk [vmem:[%s187 + $0x40] sm:$0xff] %vm229, %v433
      %560 = vst.msk [vmem:[%s187 + $0x48] sm:$0xff] %vm229, %v438
      %561 = vst.msk [vmem:[%s187 + $0x50] sm:$0xff] %vm229, %v443
      %562 = vst.msk [vmem:[%s187 + $0x58] sm:$0xff] %vm229, %v448
      %563 = vst.msk [vmem:[%s187 + $0x60] sm:$0xff] %vm229, %v453
      %564 = vst.msk [vmem:[%s187 + $0x68] sm:$0xff] %vm229, %v458
      %565 = vst.msk [vmem:[%s187 + $0x70] sm:$0xff] %vm229, %v463
      %566 = vst.msk [vmem:[%s187 + $0x78] sm:$0xff] %vm229, %v468
      %567 = vst.msk [vmem:[%s187 + $0x80] sm:$0xff] %vm229, %v473
      %568 = vst.msk [vmem:[%s187 + $0x88] sm:$0xff] %vm229, %v478
      %569 = vst.msk [vmem:[%s187 + $0x90] sm:$0xff] %vm229, %v483
      %570 = vst.msk [vmem:[%s187 + $0x98] sm:$0xff] %vm229, %v488
      %571 = vst.msk [vmem:[%s187 + $0xa0] sm:$0xff] %vm229, %v493
      %572 = vst.msk [vmem:[%s187 + $0xa8] sm:$0xff] %vm229, %v498
      %573 = vst.msk [vmem:[%s187 + $0xb0] sm:$0xff] %vm229, %v503
      %574 = vst.msk [vmem:[%s187 + $0xb8] sm:$0xff] %vm229, %v508
      %575 = vst.msk [vmem:[%s187 + $0xc0] sm:$0xff] %vm229, %v513
      %576 = vst.msk [vmem:[%s187 + $0xc8] sm:$0xff] %vm229, %v518
      %577 = vst.msk [vmem:[%s187 + $0xd0] sm:$0xff] %vm229, %v523
      %578 = vst.msk [vmem:[%s187 + $0xd8] sm:$0xff] %vm229, %v528
      %579 = vst.msk [vmem:[%s187 + $0xe0] sm:$0xff] %vm229, %v533
      %580 = vst.msk [vmem:[%s187 + $0xe8] sm:$0xff] %vm229, %v538
      %581 = vst.msk [vmem:[%s187 + $0xf0] sm:$0xff] %vm229, %v543
      %582 = vst.msk [vmem:[%s187 + $0xf8] sm:$0xff] %vm229, %v548
      %s583 = smul.u32 32, %s18
      %p584 = scmp.lt.s32.totalorder %s17, 2
      %s585 = scalar_select %p584, %s17, 2
      %p586 = scmp.lt.s32.totalorder %s583, 31
      %s587 = scalar_select %p586, %s583, 31
      %s588 = smul.addr %s585, 32
      %s589 = sadd.s32 %s587, %s588
      %s590 = smul.addr %s589, 8
      %s591 = scalar_lea.vmem %s2, %s590
      // Predicated region
      $region29: #{tpu_custom_call.1} parent=27 // pred_check
        %p592 = pneg %p97
      $region30: #{tpu_custom_call.1} parent=27 // pred_check_branch
        %594 = sbr.rel (%p592) target = $region32
      $region31: #{tpu_custom_call.1} parent=27 // pred_region
        %s595 = smul.u32 32, %s18
      $region32: #{tpu_custom_call.1} parent=27 // pred_fallthru
        _
    $region28: #{tpu_custom_call.1} parent=5 // pred_fallthru
      _
    %p596 = scmp.le.s32.totalorder 2, %s8
    // Predicated region
    $region33: #{tpu_custom_call.1} parent=5 // pred_check
      %p597 = pneg %p596
    $region34: #{tpu_custom_call.1} parent=5 // pred_check_branch
      %599 = sbr.rel (%p597) target = $region36
    $region35: #{tpu_custom_call.1} parent=5 // pred_region
      %s600 = ssub.s32 %s8, 2
      // Predicated region
      $region37: #{tpu_custom_call.1} parent=35 // pred_check
        %p601 = pneg %p103
      $region38: #{tpu_custom_call.1} parent=35 // pred_check_branch
        %603 = sbr.rel (%p601) target = $region40
      $region39: #{tpu_custom_call.1} parent=35 // pred_region
        %s604 = smul.u32 32, %s20
        %p605 = scmp.lt.s32.totalorder %s19, 2
        %s606 = scalar_select %p605, %s19, 2
        %p607 = scmp.lt.s32.totalorder %s604, 31
        %s608 = scalar_select %p607, %s604, 31
        %s609 = smul.addr %s606, 32
        %s610 = sadd.s32 %s608, %s609
        %s611 = smul.addr %s610, 8
        %s612 = scalar_lea.vmem %s2, %s611
      $region40: #{tpu_custom_call.1} parent=35 // pred_fallthru
        _
    $region36: #{tpu_custom_call.1} parent=5 // pred_fallthru
      _
  $region6: #{tpu_custom_call.1} parent=0 // loop_footer
    %s12 = sadd.s32 1, %s8
  $region7: #{tpu_custom_call.1} parent=0 // loop_footer_branch
    %7 = sbr.rel target = $region3
  $region8: #{tpu_custom_call.1} parent=0 // loop_exit
    _

</llo_original>
